<compile_context>
chip_gen: v7x
topology: tpu7x:2x2x1
jax: 0.10.0
libtpu: 0.0.40
codegen_flags: <defaults>
</compile_context>

<pallas_src>
import math
import jax
import jax.numpy as jnp
from jax import lax
from jax.experimental import pallas as pl
from jax.experimental.pallas import tpu as pltpu


# ----------------------------- kernels -----------------------------

def _noisy_linear_train_kernel(x_ref, wmu_ref, wsig_ref, ein_ref, eout_ref,
                               b_ref, o_ref, acc_sig_ref):
    k = pl.program_id(2)

    @pl.when(k == 0)
    def _():
        o_ref[...] = jnp.zeros_like(o_ref)
        acc_sig_ref[...] = jnp.zeros_like(acc_sig_ref)

    x = x_ref[...]
    # Scale x by eps_in once per (tm, tk) tile: O(tm*tk) VPU work instead of
    # forming the noisy (tn, tk) weight tile (O(tn*tk)).
    xn = x * ein_ref[...]

    # mu term accumulates straight into the (f32, k-invariant) output tile.
    o_ref[...] += lax.dot_general(
        x, wmu_ref[...],
        dimension_numbers=(((1,), (1,)), ((), ())),
        preferred_element_type=jnp.float32)

    # sigma term accumulates into the VMEM scratch.
    acc_sig_ref[...] += lax.dot_general(
        xn, wsig_ref[...],
        dimension_numbers=(((1,), (1,)), ((), ())),
        preferred_element_type=jnp.float32)

    @pl.when(k == pl.num_programs(2) - 1)
    def _():
        # Lane-dense (1, tn) eps_out row-scale + precomputed noisy bias, applied once.
        o_ref[...] = (o_ref[...]
                      + eout_ref[...] * acc_sig_ref[...]
                      + b_ref[...]).astype(o_ref.dtype)


def _noisy_linear_eval_kernel(x_ref, wmu_ref, b_ref, o_ref):
    k = pl.program_id(2)

    @pl.when(k == 0)
    def _():
        o_ref[...] = jnp.zeros_like(o_ref)

    o_ref[...] += lax.dot_general(
        x_ref[...], wmu_ref[...],
        dimension_numbers=(((1,), (1,)), ((), ())),
        preferred_element_type=jnp.float32)

    @pl.when(k == pl.num_programs(2) - 1)
    def _():
        o_ref[...] = (o_ref[...] + b_ref[...]).astype(o_ref.dtype)


# ----------------------------- helpers -----------------------------

def _round_up(x, m):
    return ((x + m - 1) // m) * m


def _pad2d(a, rows, cols):
    pr, pc = rows - a.shape[0], cols - a.shape[1]
    if pr or pc:
        a = jnp.pad(a, ((0, pr), (0, pc)))
    return a


# ----------------- one-time parameter preparation (cold path) -----------------

def prepare_noisy_linear(params, tn=256, tk=512):
    """Pad parameters / noise once (outside the per-call hot path).

    tn / tk are the OUT / IN tile granularities; both are multiples of 128
    (v5e MXU) and of 256 (v6e/v7x MXU).
    """
    OUT, IN = params["weight_mu"].shape
    OUTp = _round_up(OUT, tn)
    INp = _round_up(IN, tk)

    bias_noisy = params["bias_mu"] + params["bias_sigma"] * params["eps_out"]

    return dict(
        weight_mu=_pad2d(params["weight_mu"], OUTp, INp),
        weight_sigma=_pad2d(params["weight_sigma"], OUTp, INp),
        eps_in=_pad2d(params["eps_in"].reshape(1, IN), 1, INp),
        eps_out=_pad2d(params["eps_out"].reshape(1, OUT), 1, OUTp),
        bias_mu=_pad2d(params["bias_mu"].reshape(1, OUT), 1, OUTp),
        bias_noisy=_pad2d(bias_noisy.reshape(1, OUT), 1, OUTp),
        out_features=OUT, in_features=IN, tn=tn, tk=tk,
    )


# ----------------------------- forward (hot path) -----------------------------

def noisy_linear_forward(x, prep, training=True, tm=None):
    """x: (B, IN) f32.  prep: output of prepare_noisy_linear()."""
    B, IN = x.shape
    OUT = prep["out_features"]
    assert IN == prep["in_features"]
    OUTp, INp = prep["weight_mu"].shape
    tn, tk = prep["tn"], prep["tk"]

    # Batch tile: sublane-aligned, up to 256 at large B (fewer weight re-reads).
    if tm is None:
        cap = 256 if B >= 256 else 128
        tm = min(cap, _round_up(max(B, 1), 8))
    Bp = _round_up(B, tm)

    # Megacore: if both B and OUT collapse to a single tile, split OUT so a
    # "parallel" axis has >= 2 blocks (tn stays a multiple of 128 and divides OUTp).
    if Bp // tm == 1 and OUTp // tn == 1 and OUTp >= 256:
        tn = OUTp // 2

    xp = _pad2d(x, Bp, INp)   # only x is padded per call

    grid = (Bp // tm, OUTp // tn, INp // tk)   # reduction (IN) axis last
    x_spec = pl.BlockSpec((tm, tk), lambda i, j, k: (i, k))
    w_spec = pl.BlockSpec((tn, tk), lambda i, j, k: (j, k))
    ein_spec = pl.BlockSpec((1, tk), lambda i, j, k: (0, k))
    eout_spec = pl.BlockSpec((1, tn), lambda i, j, k: (0, j))
    bias_spec = pl.BlockSpec((1, tn), lambda i, j, k: (0, j))
    out_spec = pl.BlockSpec((tm, tn), lambda i, j, k: (i, j))
    out_shape = jax.ShapeDtypeStruct((Bp, OUTp), jnp.float32)
    cparams = pltpu.CompilerParams(
        dimension_semantics=("parallel", "parallel", "arbitrary"),
        vmem_limit_bytes=32 * 1024 * 1024)   # safe on v7x (64 MiB physical)

    if training:
        yp = pl.pallas_call(
            _noisy_linear_train_kernel,
            out_shape=out_shape,
            grid=grid,
            in_specs=[x_spec, w_spec, w_spec, ein_spec, eout_spec, bias_spec],
            out_specs=out_spec,
            scratch_shapes=[pltpu.VMEM((tm, tn), jnp.float32)],
            compiler_params=cparams,
        )(xp, prep["weight_mu"], prep["weight_sigma"],
          prep["eps_in"], prep["eps_out"], prep["bias_noisy"])
    else:
        yp = pl.pallas_call(
            _noisy_linear_eval_kernel,
            out_shape=out_shape,
            grid=grid,
            in_specs=[x_spec, w_spec, bias_spec],
            out_specs=out_spec,
            compiler_params=cparams,
        )(xp, prep["weight_mu"], prep["bias_mu"])

    return yp[:B, :OUT].astype(x.dtype)


# ----------------- deterministic parameter / noise init -----------------

def _scale_noise(key, size):
    g = jax.random.normal(key, (size,), dtype=jnp.float32)
    return jnp.sign(g) * jnp.sqrt(jnp.abs(g))


def init_noisy_linear(key, in_features, out_features, std_init=0.4):
    k_wmu, k_bmu, k_ein, k_eout = jax.random.split(key, 4)
    mu_range = 1.0 / math.sqrt(in_features)

    weight_mu = jax.random.uniform(k_wmu, (out_features, in_features),
                                   minval=-mu_range, maxval=mu_range,
                                   dtype=jnp.float32)
    weight_sigma = jnp.full((out_features, in_features),
                            std_init / math.sqrt(in_features), dtype=jnp.float32)
    bias_mu = jax.random.uniform(k_bmu, (out_features,),
                                 minval=-mu_range, maxval=mu_range,
                                 dtype=jnp.float32)
    bias_sigma = jnp.full((out_features,),
                          std_init / math.sqrt(out_features), dtype=jnp.float32)

    # Factorised noise vectors only; weight_epsilon = outer(eps_out, eps_in),
    # bias_epsilon = eps_out.  The full outer product is never materialised.
    eps_in = _scale_noise(k_ein, in_features)
    eps_out = _scale_noise(k_eout, out_features)

    return dict(weight_mu=weight_mu, weight_sigma=weight_sigma,
                bias_mu=bias_mu, bias_sigma=bias_sigma,
                eps_in=eps_in, eps_out=eps_out)


if __name__ == "__main__":
    key = jax.random.PRNGKey(0)
    k_param, k_x = jax.random.split(key)

    B, IN, OUT = 8, 32, 16
    params = init_noisy_linear(k_param, IN, OUT, std_init=0.4)
    prep = prepare_noisy_linear(params)          # one-time padding (cold path)
    x = jax.random.normal(k_x, (B, IN), dtype=jnp.float32)

    # training-mode forward (noisy weights)
    y_train = jax.block_until_ready(noisy_linear_forward(x, prep, training=True))
    # eval-mode forward (mean weights only)
    y_eval = jax.block_until_ready(noisy_linear_forward(x, prep, training=False))

    # reference check in plain JAX (explicit outer product for reference only)
    w_eps = jnp.outer(params["eps_out"], params["eps_in"])
    w_noisy = params["weight_mu"] + params["weight_sigma"] * w_eps
    b_noisy = params["bias_mu"] + params["bias_sigma"] * params["eps_out"]
    ref_train = x @ w_noisy.T + b_noisy
    ref_eval = x @ params["weight_mu"].T + params["bias_mu"]

    assert y_train.shape == (B, OUT) and y_eval.shape == (B, OUT)
    assert jnp.allclose(y_train, ref_train, atol=1e-5, rtol=1e-5)
    assert jnp.allclose(y_eval, ref_eval, atol=1e-5, rtol=1e-5)

    print("KERNEL_OK")
</pallas_src>

<mosaic_0001>
module attributes {stable_mosaic.version = 11 : i64} {
  func.func @_noisy_linear_train_kernel(%arg0: i32, %arg1: i32, %arg2: i32, %arg3: memref<8x512xf32, #tpu.memory_space<vmem>>, %arg4: memref<128x512xf32, #tpu.memory_space<vmem>>, %arg5: memref<128x512xf32, #tpu.memory_space<vmem>>, %arg6: memref<1x512xf32, #tpu.memory_space<vmem>>, %arg7: memref<1x128xf32, #tpu.memory_space<vmem>>, %arg8: memref<1x128xf32, #tpu.memory_space<vmem>>, %arg9: memref<8x128xf32, #tpu.memory_space<vmem>>, %arg10: memref<8x128xf32, #tpu.memory_space<vmem>>) attributes {dimension_semantics = [#tpu.dimension_semantics<parallel>, #tpu.dimension_semantics<parallel>, #tpu.dimension_semantics<arbitrary>], iteration_bounds = array<i64: 1, 2, 1>, scalar_prefetch = 0 : i64, scratch_operands = 1 : i64, tpu.core_type = #tpu.core_type<tc>, window_params = [{transform_indices = @transform_0, window_bounds = array<i64: 8, 512>}, {transform_indices = @transform_1, window_bounds = array<i64: 128, 512>}, {transform_indices = @transform_2, window_bounds = array<i64: 128, 512>}, {transform_indices = @transform_3, window_bounds = array<i64: 1, 512>}, {transform_indices = @transform_4, window_bounds = array<i64: 1, 128>}, {transform_indices = @transform_5, window_bounds = array<i64: 1, 128>}, {transform_indices = @transform_6, window_bounds = array<i64: 8, 128>}]} {
    %c0_i32 = arith.constant 0 : i32
    %0 = arith.cmpi eq, %arg2, %c0_i32 : i32
    %1 = arith.extui %0 : i1 to i32
    %c0_i32_0 = arith.constant 0 : i32
    %2 = arith.cmpi ne, %1, %c0_i32_0 : i32
    scf.if %2 {
      %cst_19 = arith.constant 0.000000e+00 : f32
      %20 = vector.broadcast %cst_19 : f32 to vector<8x128xf32>
      %c0_20 = arith.constant 0 : index
      %c0_21 = arith.constant 0 : index
      %21 = vector.load %arg9[%c0_20, %c0_21] : memref<8x128xf32, #tpu.memory_space<vmem>>, vector<8x128xf32>
      tpu.vector_store %arg9[%c0_20, %c0_21], %20 {strides = array<i32>} : memref<8x128xf32, #tpu.memory_space<vmem>>, vector<8x128xf32>,
      %cst_22 = arith.constant 0.000000e+00 : f32
      %22 = vector.broadcast %cst_22 : f32 to vector<8x128xf32>
      %c0_23 = arith.constant 0 : index
      %c0_24 = arith.constant 0 : index
      %23 = vector.load %arg10[%c0_23, %c0_24] : memref<8x128xf32, #tpu.memory_space<vmem>>, vector<8x128xf32>
      tpu.vector_store %arg10[%c0_23, %c0_24], %22 {strides = array<i32>} : memref<8x128xf32, #tpu.memory_space<vmem>>, vector<8x128xf32>,
    } else {
    }
    %c0 = arith.constant 0 : index
    %c0_1 = arith.constant 0 : index
    %3 = vector.load %arg3[%c0, %c0_1] : memref<8x512xf32, #tpu.memory_space<vmem>>, vector<8x512xf32>
    %c0_2 = arith.constant 0 : index
    %c0_3 = arith.constant 0 : index
    %4 = vector.load %arg6[%c0_2, %c0_3] : memref<1x512xf32, #tpu.memory_space<vmem>>, vector<1x512xf32>
    %5 = vector.broadcast %4 : vector<1x512xf32> to vector<8x512xf32>
    %6 = arith.mulf %3, %5 : vector<8x512xf32>
    %c0_4 = arith.constant 0 : index
    %c0_5 = arith.constant 0 : index
    %7 = vector.load %arg9[%c0_4, %c0_5] : memref<8x128xf32, #tpu.memory_space<vmem>>, vector<8x128xf32>
    %c0_6 = arith.constant 0 : index
    %c0_7 = arith.constant 0 : index
    %8 = vector.load %arg4[%c0_6, %c0_7] : memref<128x512xf32, #tpu.memory_space<vmem>>, vector<128x512xf32>
    %cst = arith.constant dense<0.000000e+00> : vector<8x128xf32>
    %9 = tpu.matmul %3, %8, %cst {dimension_numbers = #tpu.dot_dimension_numbers<[1], [1], [0], [0], [0, 0, 1, 0], [], []>} : vector<8x512xf32>, vector<128x512xf32>, vector<8x128xf32> -> vector<8x128xf32>
    %10 = arith.addf %7, %9 : vector<8x128xf32>
    %c0_8 = arith.constant 0 : index
    %c0_9 = arith.constant 0 : index
    %11 = vector.load %arg9[%c0_8, %c0_9] : memref<8x128xf32, #tpu.memory_space<vmem>>, vector<8x128xf32>
    tpu.vector_store %arg9[%c0_8, %c0_9], %10 {strides = array<i32>} : memref<8x128xf32, #tpu.memory_space<vmem>>, vector<8x128xf32>,
    %c0_10 = arith.constant 0 : index
    %c0_11 = arith.constant 0 : index
    %12 = vector.load %arg10[%c0_10, %c0_11] : memref<8x128xf32, #tpu.memory_space<vmem>>, vector<8x128xf32>
    %c0_12 = arith.constant 0 : index
    %c0_13 = arith.constant 0 : index
    %13 = vector.load %arg5[%c0_12, %c0_13] : memref<128x512xf32, #tpu.memory_space<vmem>>, vector<128x512xf32>
    %cst_14 = arith.constant dense<0.000000e+00> : vector<8x128xf32>
    %14 = tpu.matmul %6, %13, %cst_14 {dimension_numbers = #tpu.dot_dimension_numbers<[1], [1], [0], [0], [0, 0, 1, 0], [], []>} : vector<8x512xf32>, vector<128x512xf32>, vector<8x128xf32> -> vector<8x128xf32>
    %15 = arith.addf %12, %14 : vector<8x128xf32>
    %c0_15 = arith.constant 0 : index
    %c0_16 = arith.constant 0 : index
    %16 = vector.load %arg10[%c0_15, %c0_16] : memref<8x128xf32, #tpu.memory_space<vmem>>, vector<8x128xf32>
    tpu.vector_store %arg10[%c0_15, %c0_16], %15 {strides = array<i32>} : memref<8x128xf32, #tpu.memory_space<vmem>>, vector<8x128xf32>,
    %c0_i32_17 = arith.constant 0 : i32
    %17 = arith.cmpi eq, %arg2, %c0_i32_17 : i32
    %18 = arith.extui %17 : i1 to i32
    %c0_i32_18 = arith.constant 0 : i32
    %19 = arith.cmpi ne, %18, %c0_i32_18 : i32
    scf.if %19 {
      %c0_19 = arith.constant 0 : index
      %c0_20 = arith.constant 0 : index
      %20 = vector.load %arg9[%c0_19, %c0_20] : memref<8x128xf32, #tpu.memory_space<vmem>>, vector<8x128xf32>
      %c0_21 = arith.constant 0 : index
      %c0_22 = arith.constant 0 : index
      %21 = vector.load %arg7[%c0_21, %c0_22] : memref<1x128xf32, #tpu.memory_space<vmem>>, vector<1x128xf32>
      %c0_23 = arith.constant 0 : index
      %c0_24 = arith.constant 0 : index
      %22 = vector.load %arg10[%c0_23, %c0_24] : memref<8x128xf32, #tpu.memory_space<vmem>>, vector<8x128xf32>
      %23 = vector.broadcast %21 : vector<1x128xf32> to vector<8x128xf32>
      %24 = arith.mulf %23, %22 : vector<8x128xf32>
      %25 = arith.addf %20, %24 : vector<8x128xf32>
      %c0_25 = arith.constant 0 : index
      %c0_26 = arith.constant 0 : index
      %26 = vector.load %arg8[%c0_25, %c0_26] : memref<1x128xf32, #tpu.memory_space<vmem>>, vector<1x128xf32>
      %27 = vector.broadcast %26 : vector<1x128xf32> to vector<8x128xf32>
      %28 = arith.addf %25, %27 : vector<8x128xf32>
      %c0_27 = arith.constant 0 : index
      %c0_28 = arith.constant 0 : index
      %29 = vector.load %arg9[%c0_27, %c0_28] : memref<8x128xf32, #tpu.memory_space<vmem>>, vector<8x128xf32>
      tpu.vector_store %arg9[%c0_27, %c0_28], %28 {strides = array<i32>} : memref<8x128xf32, #tpu.memory_space<vmem>>, vector<8x128xf32>,
    } else {
    }
    return
  }
  func.func @transform_0(%arg0: i32, %arg1: i32, %arg2: i32) -> (i32, i32) {
    %c0_i32 = arith.constant 0 : i32
    return %arg0, %arg2 : i32, i32
  }
  func.func @transform_1(%arg0: i32, %arg1: i32, %arg2: i32) -> (i32, i32) {
    %c0_i32 = arith.constant 0 : i32
    return %arg1, %arg2 : i32, i32
  }
  func.func @transform_2(%arg0: i32, %arg1: i32, %arg2: i32) -> (i32, i32) {
    %c0_i32 = arith.constant 0 : i32
    return %arg1, %arg2 : i32, i32
  }
  func.func @transform_3(%arg0: i32, %arg1: i32, %arg2: i32) -> (i32, i32) {
    %c0_i32 = arith.constant 0 : i32
    %c0_i32_0 = arith.constant 0 : i32
    return %c0_i32, %arg2 : i32, i32
  }
  func.func @transform_4(%arg0: i32, %arg1: i32, %arg2: i32) -> (i32, i32) {
    %c0_i32 = arith.constant 0 : i32
    %c0_i32_0 = arith.constant 0 : i32
    return %c0_i32, %arg1 : i32, i32
  }
  func.func @transform_5(%arg0: i32, %arg1: i32, %arg2: i32) -> (i32, i32) {
    %c0_i32 = arith.constant 0 : i32
    %c0_i32_0 = arith.constant 0 : i32
    return %c0_i32, %arg1 : i32, i32
  }
  func.func @transform_6(%arg0: i32, %arg1: i32, %arg2: i32) -> (i32, i32) {
    %c0_i32 = arith.constant 0 : i32
    return %arg0, %arg1 : i32, i32
  }
}

</mosaic_0001>

<llo_original>
// kernel: tpu_custom_call.1
$region0: #{tpu_custom_call.1}
  #allocation0 [shape = 'u32[]', space=smem, size = 0x4, offset = 0x4, fixed_abs, tag = 'smem constant byte address 0x4 - core index']
  #allocation1 [shape = 'u32[144,128]{1,0:T(1,128)}', space=vmem, size = 0x12000, scoped, tag = 'internal scratch']
  #allocation2 [shape = 'f32[8,128]{1,0:T(8,128)}', space=vmem, size = 0x1000, scoped, tag = 'scratch operand']
  %s0 = inlined_call_operand.hbm [shape: f32[8,512], index: 0, kind: input, shape index: {}]
  %s1 = inlined_call_operand.hbm [shape: f32[256,512], index: 1, kind: input, shape index: {}]
  %s2 = inlined_call_operand.hbm [shape: f32[256,512], index: 2, kind: input, shape index: {}]
  %s3 = inlined_call_operand.vmem [shape: f32[1,512], index: 3, kind: input, shape index: {}]
  %s4 = inlined_call_operand.vmem [shape: f32[1,256], index: 4, kind: input, shape index: {}]
  %s5 = inlined_call_operand.vmem [shape: f32[1,256], index: 5, kind: input, shape index: {}]
  %s6 = inlined_call_operand.hbm [shape: f32[8,256], index: 6, kind: output, shape index: {}]
  %s7 = sld [smem:[#allocation0]]
  $region77: #{tpu_custom_call.1} parent=0
    _
  %s9 = ssub.s32 1, %s7
  %s10 = scalar_select 0, %s9, %s7
  $region1: #{tpu_custom_call.1} parent=0
    #allocation3 [shape = 'u8[16384]{0}', space=vmem, size = 0x4000, scoped, tag = 'input window, operand 0, single buffered']
    #allocation4 [shape = 's32[2]{0}', space=sflag, size = 0x8, scoped, tag = 'scoped memory for tpu_custom_call.1']
    #allocation5 [shape = 's32[2]{0}', space=sflag, size = 0x8, scoped, tag = 'scoped memory for tpu_custom_call.1']
    #allocation6 [shape = 'u8[524288]{0}', space=vmem, size = 0x80000, scoped, tag = 'input window, operand 1']
    #allocation7 [shape = 's32[2]{0}', space=sflag, size = 0x8, scoped, tag = 'scoped memory for tpu_custom_call.1']
    #allocation8 [shape = 'u8[524288]{0}', space=vmem, size = 0x80000, scoped, tag = 'input window, operand 2']
    #allocation9 [shape = 'u8[8192]{0}', space=vmem, size = 0x2000, scoped, tag = 'output window, operand 0']
    %11 = vsyncpa [#allocation4], 0
    %12 = vsyncpa [#allocation7], 0
    %s13 = scalar_lea.sflag [#allocation7], 1
    %14 = vsyncpa %s13, 0
    %15 = vsyncpa [#allocation5], 0
    %s16 = scalar_lea.sflag [#allocation5], 1
    %17 = vsyncpa %s16, 0
    loop: start=0, step=1, limit=4
    $region2: #{tpu_custom_call.1} parent=1 // loop_pre_header
      _
    $region3: #{tpu_custom_call.1} parent=1 // loop_header
      %s19 = sphi 0, %s23
      %p20 = scmp.ge.s32.totalorder %s19, 4
      %s26 = sphi 0, %s45
      %s27 = sphi 0, %s41
      %s28 = sphi 0, %s37
      %s29 = sphi 0, %s26
      %s30 = sphi 0, %s27
      %s31 = sphi 0, %s28
      %s32 = sphi 0, %s29
      %s33 = sphi 0, %s30
      %s34 = sphi 0, %s31
      %s50 = sphi 0, %s52
      %s53 = sphi 0, %s50
      %s54 = sphi 0, %s53
      %s70 = sphi 0, %s54
      %s78 = sphi 0, %s80
      %s81 = sphi 0, %s78
      %s82 = sphi 0, %s81
      %s98 = sphi 0, %s82
      %s106 = sphi 0, %s108
      %s109 = sphi 0, %s106
      %s110 = sphi 0, %s109
      %s126 = sphi 0, %s110
      %s132 = sphi 0, %s134
      %s135 = sphi 0, %s132
      %s136 = sphi 0, %s135
      %s152 = sphi 0, %s136
      %s158 = sphi 0, %s160
      %s161 = sphi 0, %s158
      %s162 = sphi 0, %s161
      %s178 = sphi 0, %s162
      %s184 = sphi 0, %s186
      %s187 = sphi 0, %s184
      %s188 = sphi 0, %s187
      %s204 = sphi 0, %s188
      %s212 = sphi 0, %s214
      %s215 = sphi 0, %s212
      %s216 = sphi 0, %s215
      %s232 = sphi 0, %s216
    $region4: #{tpu_custom_call.1} parent=1 // loop_header_branch
      %22 = sbr.rel (%p20) target = $region8
    $region5: #{tpu_custom_call.1} parent=1 // loop_body
      %s24 = ssub.s32 %s19, 1
      %s25 = ssub.s32 %s19, 2
      %s35 = sadd.s32 1, %s28
      %p36 = scmp.ge.s32.totalorder %s35, 1
      %s37 = scalar_select %p36, 0, %s35
      %s38 = sadd.s32 1, %s27
      %s39 = scalar_select %p36, %s38, %s27
      %p40 = scmp.ge.s32.totalorder %s39, 2
      %s41 = scalar_select %p40, 0, %s39
      %s42 = sadd.s32 1, %s26
      %s43 = scalar_select %p40, %s42, %s26
      %p44 = scmp.ge.s32.totalorder %s43, 1
      %s45 = scalar_select %p44, 0, %s43
      %s46 = ssub.s32 %s26, %s45
      %s47 = ssub.s32 %s28, %s37
      %s48 = sor.u32 %s46, %s47
      %p49 = scmp.eq.s32.totalorder %s48, 0
      %s51 = sadd.s32 %s50, 1
      %s52 = scalar_select %p49, %s50, %s51
      %p55 = pneg %p49
      %p56 = scmp.eq.s32.totalorder %s19, 1
      %p57 = por %p55, %p56
      %p58 = scmp.ne.s32.totalorder %s50, %s53
      %p59 = scmp.eq.s32.totalorder %s19, 0
      %p60 = por %p58, %p59
      %p61 = scmp.ne.s32.totalorder %s50, %s53
      %p62 = scmp.eq.s32.totalorder %s24, 1
      %p63 = por %p61, %p62
      %p64 = scmp.ne.s32.totalorder %s53, %s54
      %p65 = scmp.eq.s32.totalorder %s24, 0
      %p66 = por %p64, %p65
      %p67 = scmp.ne.s32.totalorder %s53, %s54
      %p68 = scmp.eq.s32.totalorder %s25, 1
      %p69 = por %p67, %p68
      %p71 = scmp.ne.s32.totalorder %s54, %s70
      %p72 = scmp.eq.s32.totalorder %s25, 0
      %p73 = por %p71, %p72
      %s74 = ssub.s32 %s27, %s41
      %s75 = ssub.s32 %s28, %s37
      %s76 = sor.u32 %s74, %s75
      %p77 = scmp.eq.s32.totalorder %s76, 0
      %s79 = sadd.s32 %s78, 1
      %s80 = scalar_select %p77, %s78, %s79
      %p83 = pneg %p77
      %p84 = scmp.eq.s32.totalorder %s19, 1
      %p85 = por %p83, %p84
      %p86 = scmp.ne.s32.totalorder %s78, %s81
      %p87 = scmp.eq.s32.totalorder %s19, 0
      %p88 = por %p86, %p87
      %p89 = scmp.ne.s32.totalorder %s78, %s81
      %p90 = scmp.eq.s32.totalorder %s24, 1
      %p91 = por %p89, %p90
      %p92 = scmp.ne.s32.totalorder %s81, %s82
      %p93 = scmp.eq.s32.totalorder %s24, 0
      %p94 = por %p92, %p93
      %p95 = scmp.ne.s32.totalorder %s81, %s82
      %p96 = scmp.eq.s32.totalorder %s25, 1
      %p97 = por %p95, %p96
      %p99 = scmp.ne.s32.totalorder %s82, %s98
      %p100 = scmp.eq.s32.totalorder %s25, 0
      %p101 = por %p99, %p100
      %s102 = ssub.s32 %s27, %s41
      %s103 = ssub.s32 %s28, %s37
      %s104 = sor.u32 %s102, %s103
      %p105 = scmp.eq.s32.totalorder %s104, 0
      %s107 = sadd.s32 %s106, 1
      %s108 = scalar_select %p105, %s106, %s107
      %p111 = pneg %p105
      %p112 = scmp.eq.s32.totalorder %s19, 1
      %p113 = por %p111, %p112
      %p114 = scmp.ne.s32.totalorder %s106, %s109
      %p115 = scmp.eq.s32.totalorder %s19, 0
      %p116 = por %p114, %p115
      %p117 = scmp.ne.s32.totalorder %s106, %s109
      %p118 = scmp.eq.s32.totalorder %s24, 1
      %p119 = por %p117, %p118
      %p120 = scmp.ne.s32.totalorder %s109, %s110
      %p121 = scmp.eq.s32.totalorder %s24, 0
      %p122 = por %p120, %p121
      %p123 = scmp.ne.s32.totalorder %s109, %s110
      %p124 = scmp.eq.s32.totalorder %s25, 1
      %p125 = por %p123, %p124
      %p127 = scmp.ne.s32.totalorder %s110, %s126
      %p128 = scmp.eq.s32.totalorder %s25, 0
      %p129 = por %p127, %p128
      %s130 = ssub.s32 %s28, %s37
      %p131 = scmp.eq.s32.totalorder %s130, 0
      %s133 = sadd.s32 %s132, 1
      %s134 = scalar_select %p131, %s132, %s133
      %p137 = pneg %p131
      %p138 = scmp.eq.s32.totalorder %s19, 1
      %p139 = por %p137, %p138
      %p140 = scmp.ne.s32.totalorder %s132, %s135
      %p141 = scmp.eq.s32.totalorder %s19, 0
      %p142 = por %p140, %p141
      %p143 = scmp.ne.s32.totalorder %s132, %s135
      %p144 = scmp.eq.s32.totalorder %s24, 1
      %p145 = por %p143, %p144
      %p146 = scmp.ne.s32.totalorder %s135, %s136
      %p147 = scmp.eq.s32.totalorder %s24, 0
      %p148 = por %p146, %p147
      %p149 = scmp.ne.s32.totalorder %s135, %s136
      %p150 = scmp.eq.s32.totalorder %s25, 1
      %p151 = por %p149, %p150
      %p153 = scmp.ne.s32.totalorder %s136, %s152
      %p154 = scmp.eq.s32.totalorder %s25, 0
      %p155 = por %p153, %p154
      %s156 = ssub.s32 %s27, %s41
      %p157 = scmp.eq.s32.totalorder %s156, 0
      %s159 = sadd.s32 %s158, 1
      %s160 = scalar_select %p157, %s158, %s159
      %p163 = pneg %p157
      %p164 = scmp.eq.s32.totalorder %s19, 1
      %p165 = por %p163, %p164
      %p166 = scmp.ne.s32.totalorder %s158, %s161
      %p167 = scmp.eq.s32.totalorder %s19, 0
      %p168 = por %p166, %p167
      %p169 = scmp.ne.s32.totalorder %s158, %s161
      %p170 = scmp.eq.s32.totalorder %s24, 1
      %p171 = por %p169, %p170
      %p172 = scmp.ne.s32.totalorder %s161, %s162
      %p173 = scmp.eq.s32.totalorder %s24, 0
      %p174 = por %p172, %p173
      %p175 = scmp.ne.s32.totalorder %s161, %s162
      %p176 = scmp.eq.s32.totalorder %s25, 1
      %p177 = por %p175, %p176
      %p179 = scmp.ne.s32.totalorder %s162, %s178
      %p180 = scmp.eq.s32.totalorder %s25, 0
      %p181 = por %p179, %p180
      %s182 = ssub.s32 %s27, %s41
      %p183 = scmp.eq.s32.totalorder %s182, 0
      %s185 = sadd.s32 %s184, 1
      %s186 = scalar_select %p183, %s184, %s185
      %p189 = pneg %p183
      %p190 = scmp.eq.s32.totalorder %s19, 1
      %p191 = por %p189, %p190
      %p192 = scmp.ne.s32.totalorder %s184, %s187
      %p193 = scmp.eq.s32.totalorder %s19, 0
      %p194 = por %p192, %p193
      %p195 = scmp.ne.s32.totalorder %s184, %s187
      %p196 = scmp.eq.s32.totalorder %s24, 1
      %p197 = por %p195, %p196
      %p198 = scmp.ne.s32.totalorder %s187, %s188
      %p199 = scmp.eq.s32.totalorder %s24, 0
      %p200 = por %p198, %p199
      %p201 = scmp.ne.s32.totalorder %s187, %s188
      %p202 = scmp.eq.s32.totalorder %s25, 1
      %p203 = por %p201, %p202
      %p205 = scmp.ne.s32.totalorder %s188, %s204
      %p206 = scmp.eq.s32.totalorder %s25, 0
      %p207 = por %p205, %p206
      %s208 = ssub.s32 %s26, %s45
      %s209 = ssub.s32 %s27, %s41
      %s210 = sor.u32 %s208, %s209
      %p211 = scmp.eq.s32.totalorder %s210, 0
      %s213 = sadd.s32 %s212, 1
      %s214 = scalar_select %p211, %s212, %s213
      %p217 = pneg %p211
      %p218 = scmp.eq.s32.totalorder %s19, 1
      %p219 = por %p217, %p218
      %p220 = scmp.ne.s32.totalorder %s212, %s215
      %p221 = scmp.eq.s32.totalorder %s19, 0
      %p222 = por %p220, %p221
      %p223 = scmp.ne.s32.totalorder %s212, %s215
      %p224 = scmp.eq.s32.totalorder %s24, 1
      %p225 = por %p223, %p224
      %p226 = scmp.ne.s32.totalorder %s215, %s216
      %p227 = scmp.eq.s32.totalorder %s24, 0
      %p228 = por %p226, %p227
      %p229 = scmp.ne.s32.totalorder %s215, %s216
      %p230 = scmp.eq.s32.totalorder %s25, 1
      %p231 = por %p229, %p230
      %p233 = scmp.ne.s32.totalorder %s216, %s232
      %p234 = scmp.eq.s32.totalorder %s25, 0
      %p235 = por %p233, %p234
      %p236 = scmp.le.s32.totalorder 1, %s19
      %p237 = scmp.lt.s32.totalorder %s19, 3
      %p238 = pnand %p236, %p237
      %p239 = pneg %p238
      // Predicated region
      $region9: #{tpu_custom_call.1} parent=5 // pred_check
        _
      $region10: #{tpu_custom_call.1} parent=5 // pred_check_branch
        %241 = sbr.rel (%p238) target = $region12
      $region11: #{tpu_custom_call.1} parent=5 // pred_region
        %s242 = ssub.s32 %s19, 1
        // Predicated region
        $region13: #{tpu_custom_call.1} parent=11 // pred_check
          %p243 = pneg %p66
        $region14: #{tpu_custom_call.1} parent=11 // pred_check_branch
          %245 = sbr.rel (%p243) target = $region16
        $region15: #{tpu_custom_call.1} parent=11 // pred_region
          %s246 = smul.u32 4, %s31
          %s248 = ssub.s32 512, 512
          %249 = vsyncadd [#allocation4], %s248
          %s250 = smul.addr %s29, 4
          %s251 = sadd.s32 %s246, %s250
          %s252 = smul.addr %s251, 128
          %s253 = scalar_lea.hbm %s0, %s252
          %s255 = sshll.u32 [#allocation3], 4
          %s256 = int_to_ptr.vmem [resolvable:$true] %s255
          %258 = dma.hbm_to_vmem [thread:$0]  %s253, 512, %s256, [#allocation4]
        $region16: #{tpu_custom_call.1} parent=11 // pred_fallthru
          _
        // Predicated region
        $region17: #{tpu_custom_call.1} parent=11 // pred_check
          %p259 = pneg %p148
        $region18: #{tpu_custom_call.1} parent=11 // pred_check_branch
          %261 = sbr.rel (%p259) target = $region20
        $region19: #{tpu_custom_call.1} parent=11 // pred_region
          %s262 = smul.u32 4, %s31
          %p263 = scmp.lt.s32.totalorder %s262, 3
          %s264 = scalar_select %p263, %s262, 3
          %s265 = scalar_lea.vmem %s3, %s264
          %s266 = smul.u32 4, %s31
        $region20: #{tpu_custom_call.1} parent=11 // pred_fallthru
          _
      $region12: #{tpu_custom_call.1} parent=5 // pred_fallthru
        _
      %p267 = scmp.lt.s32.totalorder %s19, 2
      // Predicated region
      $region21: #{tpu_custom_call.1} parent=5 // pred_check
        %p268 = pneg %p267
      $region22: #{tpu_custom_call.1} parent=5 // pred_check_branch
        %270 = sbr.rel (%p268) target = $region24
      $region23: #{tpu_custom_call.1} parent=5 // pred_region
        // Predicated region
        $region25: #{tpu_custom_call.1} parent=23 // pred_check
          %p271 = pneg %p88
        $region26: #{tpu_custom_call.1} parent=23 // pred_check_branch
          %273 = sbr.rel (%p271) target = $region28
        $region27: #{tpu_custom_call.1} parent=23 // pred_region
          %s274 = sand.u32 %s19, 1
          %s275 = scalar_lea.sflag [#allocation7], %s274
          %s276 = sand.u32 %s78, 1
          %s277 = smul.addr %s276, 512
          %s278 = scalar_lea.vmem [#allocation6], %s277
          %s279 = smul.u32 16, %s27
          %s280 = smul.u32 4, %s28
          %s282 = ssub.s32 8192, 8192
          %283 = vsyncadd %s275, %s282
          %s284 = smul.addr %s279, 4
          %s285 = sadd.s32 %s280, %s284
          %s286 = smul.addr %s285, 128
          %s287 = scalar_lea.hbm %s1, %s286
          %s288 = sshll.u32 %s278, 4
          %s289 = int_to_ptr.vmem [resolvable:$true] %s288
          %294 = dma.hbm_to_vmem [thread:$0]  %s287, 8192, %s289, %s275, 512, 512, 32
        $region28: #{tpu_custom_call.1} parent=23 // pred_fallthru
          _
        // Predicated region
        $region29: #{tpu_custom_call.1} parent=23 // pred_check
          %p295 = pneg %p116
        $region30: #{tpu_custom_call.1} parent=23 // pred_check_branch
          %297 = sbr.rel (%p295) target = $region32
        $region31: #{tpu_custom_call.1} parent=23 // pred_region
          %s298 = sand.u32 %s19, 1
          %s299 = scalar_lea.sflag [#allocation7], %s298
          %s300 = sand.u32 %s106, 1
          %s301 = smul.addr %s300, 512
          %s302 = scalar_lea.vmem [#allocation8], %s301
          %s303 = smul.u32 16, %s27
          %s304 = smul.u32 4, %s28
          %s306 = ssub.s32 8192, 8192
          %307 = vsyncadd %s299, %s306
          %s308 = smul.addr %s303, 4
          %s309 = sadd.s32 %s304, %s308
          %s310 = smul.addr %s309, 128
          %s311 = scalar_lea.hbm %s2, %s310
          %s312 = sshll.u32 %s302, 4
          %s313 = int_to_ptr.vmem [resolvable:$true] %s312
          %318 = dma.hbm_to_vmem [thread:$0]  %s311, 8192, %s313, %s299, 512, 512, 32
        $region32: #{tpu_custom_call.1} parent=23 // pred_fallthru
          _
        // Predicated region
        $region33: #{tpu_custom_call.1} parent=23 // pred_check
          %p319 = pneg %p168
        $region34: #{tpu_custom_call.1} parent=23 // pred_check_branch
          %321 = sbr.rel (%p319) target = $region36
        $region35: #{tpu_custom_call.1} parent=23 // pred_region
          %p322 = scmp.lt.s32.totalorder %s27, 1
          %s323 = scalar_select %p322, %s27, 1
          %s324 = scalar_lea.vmem %s4, %s323
        $region36: #{tpu_custom_call.1} parent=23 // pred_fallthru
          _
        // Predicated region
        $region37: #{tpu_custom_call.1} parent=23 // pred_check
          %p325 = pneg %p194
        $region38: #{tpu_custom_call.1} parent=23 // pred_check_branch
          %327 = sbr.rel (%p325) target = $region40
        $region39: #{tpu_custom_call.1} parent=23 // pred_region
          %p328 = scmp.lt.s32.totalorder %s27, 1
          %s329 = scalar_select %p328, %s27, 1
          %s330 = scalar_lea.vmem %s5, %s329
        $region40: #{tpu_custom_call.1} parent=23 // pred_fallthru
          _
      $region24: #{tpu_custom_call.1} parent=5 // pred_fallthru
        _
      %p331 = scmp.le.s32.totalorder 1, %s19
      %p332 = scmp.lt.s32.totalorder %s19, 3
      %p333 = pnand %p331, %p332
      %p334 = pneg %p333
      // Predicated region
      $region41: #{tpu_custom_call.1} parent=5 // pred_check
        _
      $region42: #{tpu_custom_call.1} parent=5 // pred_check_branch
        %336 = sbr.rel (%p333) target = $region44
      $region43: #{tpu_custom_call.1} parent=5 // pred_region
        %s337 = ssub.s32 %s19, 1
        // Predicated region
        $region45: #{tpu_custom_call.1} parent=43 // pred_check
          %p338 = pneg %p66
        $region46: #{tpu_custom_call.1} parent=43 // pred_check_branch
          %340 = sbr.rel (%p338) target = $region48
        $region47: #{tpu_custom_call.1} parent=43 // pred_region
          %341 = dma.done [#allocation4], 512
        $region48: #{tpu_custom_call.1} parent=43 // pred_fallthru
          _
        %s342 = sand.u32 %s24, 1
        %s343 = scalar_lea.sflag [#allocation7], %s342
        %s344 = sand.u32 %s81, 1
        %s345 = smul.addr %s344, 512
        %s346 = scalar_lea.vmem [#allocation6], %s345
        // Predicated region
        $region49: #{tpu_custom_call.1} parent=43 // pred_check
          %p347 = pneg %p94
        $region50: #{tpu_custom_call.1} parent=43 // pred_check_branch
          %349 = sbr.rel (%p347) target = $region52
        $region51: #{tpu_custom_call.1} parent=43 // pred_region
          %350 = dma.done %s343, 8192
        $region52: #{tpu_custom_call.1} parent=43 // pred_fallthru
          _
        %s351 = sand.u32 %s24, 1
        %s352 = scalar_lea.sflag [#allocation7], %s351
        %s353 = sand.u32 %s109, 1
        %s354 = smul.addr %s353, 512
        %s355 = scalar_lea.vmem [#allocation8], %s354
        // Predicated region
        $region53: #{tpu_custom_call.1} parent=43 // pred_check
          %p356 = pneg %p122
        $region54: #{tpu_custom_call.1} parent=43 // pred_check_branch
          %358 = sbr.rel (%p356) target = $region56
        $region55: #{tpu_custom_call.1} parent=43 // pred_region
          %359 = dma.done %s352, 8192
        $region56: #{tpu_custom_call.1} parent=43 // pred_fallthru
          _
        %p360 = pneg %p66
        %p361 = pneg %p63
        %s362 = sand.u32 %s24, 1
        %s363 = scalar_lea.sflag [#allocation7], %s362
        %s364 = sand.u32 %s81, 1
        %s365 = smul.addr %s364, 512
        %s366 = scalar_lea.vmem [#allocation6], %s365
        %p367 = pneg %p94
        %p368 = pneg %p91
        %s369 = sand.u32 %s24, 1
        %s370 = scalar_lea.sflag [#allocation7], %s369
        %s371 = sand.u32 %s109, 1
        %s372 = smul.addr %s371, 512
        %s373 = scalar_lea.vmem [#allocation8], %s372
        %p374 = pneg %p122
        %p375 = pneg %p119
        %s376 = smul.u32 4, %s31
        %p377 = scmp.lt.s32.totalorder %s376, 3
        %s378 = scalar_select %p377, %s376, 3
        %s379 = scalar_lea.vmem %s3, %s378
        %p380 = pneg %p148
        %p381 = pneg %p145
        %p382 = scmp.lt.s32.totalorder %s30, 1
        %s383 = scalar_select %p382, %s30, 1
        %s384 = scalar_lea.vmem %s4, %s383
        %p385 = pneg %p174
        %p386 = pneg %p171
        %p387 = scmp.lt.s32.totalorder %s30, 1
        %s388 = scalar_select %p387, %s30, 1
        %s389 = scalar_lea.vmem %s5, %s388
        %p390 = pneg %p200
        %p391 = pneg %p197
        %p392 = pneg %p228
        %p393 = pneg %p225
        %s394 = sand.u32 %s215, 1
        %s395 = scalar_lea.sflag [#allocation5], %s394
        %s396 = sand.u32 %s215, 1
        %s397 = smul.addr %s396, 8
        %s398 = scalar_lea.vmem [#allocation9], %s397
        %s399 = smul.u32 4, %s31
        %s400 = smul.u32 16, %s30
        %s401 = smul.u32 4, %s31
        %s402 = smul.u32 16, %s30
        %s403 = smul.u32 4, %s31
        %s404 = smul.u32 4, %s31
        %p405 = scmp.lt.s32.totalorder %s404, 3
        %s406 = scalar_select %p405, %s404, 3
        %s407 = scalar_lea.vmem %s3, %s406
        %s408 = smul.u32 4, %s31
        %p409 = scmp.lt.s32.totalorder %s30, 1
        %s410 = scalar_select %p409, %s30, 1
        %s411 = scalar_lea.vmem %s4, %s410
        %p412 = scmp.lt.s32.totalorder %s30, 1
        %s413 = scalar_select %p412, %s30, 1
        %s414 = scalar_lea.vmem %s5, %s413
        %p415 = scmp.eq.s32.totalorder %s31, 0
        // Predicated region
        $region57: #{tpu_custom_call.1} parent=43 // pred_check
          %p416 = pneg %p415
        $region58: #{tpu_custom_call.1} parent=43 // pred_check_branch
          %418 = sbr.rel (%p416) target = $region60
        $region59: #{tpu_custom_call.1} parent=43 // pred_region
          %419 = vst [vmem:[%s398] sm:$0xff] 0.0
          %420 = vst [vmem:[#allocation2] sm:$0xff] 0.0
        $region60: #{tpu_custom_call.1} parent=43 // pred_fallthru
          _
        %v421 = vld [vmem:[#allocation3] sm:$0xff]
        %v422 = vld [vmem:[#allocation3 + $0x8] sm:$0xff]
        %v423 = vld [vmem:[#allocation3 + $0x10] sm:$0xff]
        %v424 = vld [vmem:[#allocation3 + $0x18] sm:$0xff]
        %v425 = vld [vmem:[%s407] sm:$0xf]
        %v427 = vlaneseq
        %v428 = vshrl.u32 %v427, 7
        %v429 = vsub.s32 0, %v428
        %v430 = vrot.slane %v425, %v429
        %v431 = vlaneseq
        %v432 = vshrl.u32 %v431, 7
        %v433 = vsub.s32 1, %v432
        %v434 = vrot.slane %v425, %v433
        %v435 = vlaneseq
        %v436 = vshrl.u32 %v435, 7
        %v437 = vsub.s32 2, %v436
        %v438 = vrot.slane %v425, %v437
        %v439 = vlaneseq
        %v440 = vshrl.u32 %v439, 7
        %v441 = vsub.s32 3, %v440
        %v442 = vrot.slane %v425, %v441
        %v447 = vmul.f32 %v421, %v430
        %v448 = vmul.f32 %v422, %v434
        %v449 = vmul.f32 %v423, %v438
        %v450 = vmul.f32 %v424, %v442
        %v451 = vld [vmem:[%s398] sm:$0xff]
        %v452 = vld [vmem:[%s346] sm:$0xff]
        %v453 = vld [vmem:[%s346 + $0x8] sm:$0xff]
        %v454 = vld [vmem:[%s346 + $0x10] sm:$0xff]
        %v455 = vld [vmem:[%s346 + $0x18] sm:$0xff]
        %v456 = vld [vmem:[%s346 + $0x20] sm:$0xff]
        %v457 = vld [vmem:[%s346 + $0x28] sm:$0xff]
        %v458 = vld [vmem:[%s346 + $0x30] sm:$0xff]
        %v459 = vld [vmem:[%s346 + $0x38] sm:$0xff]
        %v460 = vld [vmem:[%s346 + $0x40] sm:$0xff]
        %v461 = vld [vmem:[%s346 + $0x48] sm:$0xff]
        %v462 = vld [vmem:[%s346 + $0x50] sm:$0xff]
        %v463 = vld [vmem:[%s346 + $0x58] sm:$0xff]
        %v464 = vld [vmem:[%s346 + $0x60] sm:$0xff]
        %v465 = vld [vmem:[%s346 + $0x68] sm:$0xff]
        %v466 = vld [vmem:[%s346 + $0x70] sm:$0xff]
        %v467 = vld [vmem:[%s346 + $0x78] sm:$0xff]
        %v468 = vld [vmem:[%s346 + $0x80] sm:$0xff]
        %v469 = vld [vmem:[%s346 + $0x88] sm:$0xff]
        %v470 = vld [vmem:[%s346 + $0x90] sm:$0xff]
        %v471 = vld [vmem:[%s346 + $0x98] sm:$0xff]
        %v472 = vld [vmem:[%s346 + $0xa0] sm:$0xff]
        %v473 = vld [vmem:[%s346 + $0xa8] sm:$0xff]
        %v474 = vld [vmem:[%s346 + $0xb0] sm:$0xff]
        %v475 = vld [vmem:[%s346 + $0xb8] sm:$0xff]
        %v476 = vld [vmem:[%s346 + $0xc0] sm:$0xff]
        %v477 = vld [vmem:[%s346 + $0xc8] sm:$0xff]
        %v478 = vld [vmem:[%s346 + $0xd0] sm:$0xff]
        %v479 = vld [vmem:[%s346 + $0xd8] sm:$0xff]
        %v480 = vld [vmem:[%s346 + $0xe0] sm:$0xff]
        %v481 = vld [vmem:[%s346 + $0xe8] sm:$0xff]
        %v482 = vld [vmem:[%s346 + $0xf0] sm:$0xff]
        %v483 = vld [vmem:[%s346 + $0xf8] sm:$0xff]
        %v484 = vld [vmem:[%s346 + $0x100] sm:$0xff]
        %v485 = vld [vmem:[%s346 + $0x108] sm:$0xff]
        %v486 = vld [vmem:[%s346 + $0x110] sm:$0xff]
        %v487 = vld [vmem:[%s346 + $0x118] sm:$0xff]
        %v488 = vld [vmem:[%s346 + $0x120] sm:$0xff]
        %v489 = vld [vmem:[%s346 + $0x128] sm:$0xff]
        %v490 = vld [vmem:[%s346 + $0x130] sm:$0xff]
        %v491 = vld [vmem:[%s346 + $0x138] sm:$0xff]
        %v492 = vld [vmem:[%s346 + $0x140] sm:$0xff]
        %v493 = vld [vmem:[%s346 + $0x148] sm:$0xff]
        %v494 = vld [vmem:[%s346 + $0x150] sm:$0xff]
        %v495 = vld [vmem:[%s346 + $0x158] sm:$0xff]
        %v496 = vld [vmem:[%s346 + $0x160] sm:$0xff]
        %v497 = vld [vmem:[%s346 + $0x168] sm:$0xff]
        %v498 = vld [vmem:[%s346 + $0x170] sm:$0xff]
        %v499 = vld [vmem:[%s346 + $0x178] sm:$0xff]
        %v500 = vld [vmem:[%s346 + $0x180] sm:$0xff]
        %v501 = vld [vmem:[%s346 + $0x188] sm:$0xff]
        %v502 = vld [vmem:[%s346 + $0x190] sm:$0xff]
        %v503 = vld [vmem:[%s346 + $0x198] sm:$0xff]
        %v504 = vld [vmem:[%s346 + $0x1a0] sm:$0xff]
        %v505 = vld [vmem:[%s346 + $0x1a8] sm:$0xff]
        %v506 = vld [vmem:[%s346 + $0x1b0] sm:$0xff]
        %v507 = vld [vmem:[%s346 + $0x1b8] sm:$0xff]
        %v508 = vld [vmem:[%s346 + $0x1c0] sm:$0xff]
        %v509 = vld [vmem:[%s346 + $0x1c8] sm:$0xff]
        %v510 = vld [vmem:[%s346 + $0x1d0] sm:$0xff]
        %v511 = vld [vmem:[%s346 + $0x1d8] sm:$0xff]
        %v512 = vld [vmem:[%s346 + $0x1e0] sm:$0xff]
        %v513 = vld [vmem:[%s346 + $0x1e8] sm:$0xff]
        %v514 = vld [vmem:[%s346 + $0x1f0] sm:$0xff]
        %v515 = vld [vmem:[%s346 + $0x1f8] sm:$0xff]
        %516 = vmatprep.subr.mxu0 %v453
        %517 = vmatpush1.xpose.msra.mxu0 %v452
        %518 = vmatprep.subr.mxu0 %v457
        %519 = vmatpush1.xpose.msra.mxu0 %v456
        %520 = vmatprep.subr.mxu0 %v461
        %521 = vmatpush1.xpose.msra.mxu0 %v460
        %522 = vmatprep.subr.mxu0 %v465
        %523 = vmatpush1.xpose.msra.mxu0 %v464
        %524 = vmatprep.subr.mxu0 %v469
        %525 = vmatpush1.xpose.msra.mxu0 %v468
        %526 = vmatprep.subr.mxu0 %v473
        %527 = vmatpush1.xpose.msra.mxu0 %v472
        %528 = vmatprep.subr.mxu0 %v477
        %529 = vmatpush1.xpose.msra.mxu0 %v476
        %530 = vmatprep.subr.mxu0 %v481
        %531 = vmatpush1.xpose.msra.mxu0 %v480
        %532 = vmatprep.subr.mxu0 %v485
        %533 = vmatpush1.xpose.msra.mxu0 %v484
        %534 = vmatprep.subr.mxu0 %v489
        %535 = vmatpush1.xpose.msra.mxu0 %v488
        %536 = vmatprep.subr.mxu0 %v493
        %537 = vmatpush1.xpose.msra.mxu0 %v492
        %538 = vmatprep.subr.mxu0 %v497
        %539 = vmatpush1.xpose.msra.mxu0 %v496
        %540 = vmatprep.subr.mxu0 %v501
        %541 = vmatpush1.xpose.msra.mxu0 %v500
        %542 = vmatprep.subr.mxu0 %v505
        %543 = vmatpush1.xpose.msra.mxu0 %v504
        %544 = vmatprep.subr.mxu0 %v509
        %545 = vmatpush1.xpose.msra.mxu0 %v508
        %546 = vmatprep.subr.mxu0 %v513
        %547 = vmatpush1.xpose.msra.mxu0 %v512
        %548 = vmatprep.subr.mxu0 0.0
        %549 = vmatpush1.xpose.msra.mxu0 0.0
        %550 = vmatprep.subr.mxu0 0.0
        %551 = vmatpush1.xpose.msra.mxu0 0.0
        %552 = vmatprep.subr.mxu0 0.0
        %553 = vmatpush1.xpose.msra.mxu0 0.0
        %554 = vmatprep.subr.mxu0 0.0
        %555 = vmatpush1.xpose.msra.mxu0 0.0
        %556 = vmatprep.subr.mxu0 0.0
        %557 = vmatpush1.xpose.msra.mxu0 0.0
        %558 = vmatprep.subr.mxu0 0.0
        %559 = vmatpush1.xpose.msra.mxu0 0.0
        %560 = vmatprep.subr.mxu0 0.0
        %561 = vmatpush1.xpose.msra.mxu0 0.0
        %562 = vmatprep.subr.mxu0 0.0
        %563 = vmatpush1.xpose.msra.mxu0 0.0
        %564 = vmatprep.subr.mxu0 0.0
        %565 = vmatpush1.xpose.msra.mxu0 0.0
        %566 = vmatprep.subr.mxu0 0.0
        %567 = vmatpush1.xpose.msra.mxu0 0.0
        %568 = vmatprep.subr.mxu0 0.0
        %569 = vmatpush1.xpose.msra.mxu0 0.0
        %570 = vmatprep.subr.mxu0 0.0
        %571 = vmatpush1.xpose.msra.mxu0 0.0
        %572 = vmatprep.subr.mxu0 0.0
        %573 = vmatpush1.xpose.msra.mxu0 0.0
        %574 = vmatprep.subr.mxu0 0.0
        %575 = vmatpush1.xpose.msra.mxu0 0.0
        %576 = vmatprep.subr.mxu0 0.0
        %577 = vmatpush1.xpose.msra.mxu0 0.0
        %578 = vmatprep.subr.mxu0 0.0
        %579 = vmatpush1.xpose.msra.mxu0 0.0
        %580 = vmatprep.mubr.f32.mxu0 %v422
        %581 = vmatmul.mubr.f32.gmra.mrb[0].mxu0 %v421
        %v582 = vpop.f32.mrb[0].mxu0
        %v583 = vadd.f32 0.0, %v582
        %v584 = vpop.f32.mrb[0].mxu0
        %585 = vdwg.mxu0
        %586 = vmatprep.subr.mxu0 %v455
        %587 = vmatpush1.xpose.msra.mxu0 %v454
        %588 = vmatprep.subr.mxu0 %v459
        %589 = vmatpush1.xpose.msra.mxu0 %v458
        %590 = vmatprep.subr.mxu0 %v463
        %591 = vmatpush1.xpose.msra.mxu0 %v462
        %592 = vmatprep.subr.mxu0 %v467
        %593 = vmatpush1.xpose.msra.mxu0 %v466
        %594 = vmatprep.subr.mxu0 %v471
        %595 = vmatpush1.xpose.msra.mxu0 %v470
        %596 = vmatprep.subr.mxu0 %v475
        %597 = vmatpush1.xpose.msra.mxu0 %v474
        %598 = vmatprep.subr.mxu0 %v479
        %599 = vmatpush1.xpose.msra.mxu0 %v478
        %600 = vmatprep.subr.mxu0 %v483
        %601 = vmatpush1.xpose.msra.mxu0 %v482
        %602 = vmatprep.subr.mxu0 %v487
        %603 = vmatpush1.xpose.msra.mxu0 %v486
        %604 = vmatprep.subr.mxu0 %v491
        %605 = vmatpush1.xpose.msra.mxu0 %v490
        %606 = vmatprep.subr.mxu0 %v495
        %607 = vmatpush1.xpose.msra.mxu0 %v494
        %608 = vmatprep.subr.mxu0 %v499
        %609 = vmatpush1.xpose.msra.mxu0 %v498
        %610 = vmatprep.subr.mxu0 %v503
        %611 = vmatpush1.xpose.msra.mxu0 %v502
        %612 = vmatprep.subr.mxu0 %v507
        %613 = vmatpush1.xpose.msra.mxu0 %v506
        %614 = vmatprep.subr.mxu0 %v511
        %615 = vmatpush1.xpose.msra.mxu0 %v510
        %616 = vmatprep.subr.mxu0 %v515
        %617 = vmatpush1.xpose.msra.mxu0 %v514
        %618 = vmatprep.subr.mxu0 0.0
        %619 = vmatpush1.xpose.msra.mxu0 0.0
        %620 = vmatprep.subr.mxu0 0.0
        %621 = vmatpush1.xpose.msra.mxu0 0.0
        %622 = vmatprep.subr.mxu0 0.0
        %623 = vmatpush1.xpose.msra.mxu0 0.0
        %624 = vmatprep.subr.mxu0 0.0
        %625 = vmatpush1.xpose.msra.mxu0 0.0
        %626 = vmatprep.subr.mxu0 0.0
        %627 = vmatpush1.xpose.msra.mxu0 0.0
        %628 = vmatprep.subr.mxu0 0.0
        %629 = vmatpush1.xpose.msra.mxu0 0.0
        %630 = vmatprep.subr.mxu0 0.0
        %631 = vmatpush1.xpose.msra.mxu0 0.0
        %632 = vmatprep.subr.mxu0 0.0
        %633 = vmatpush1.xpose.msra.mxu0 0.0
        %634 = vmatprep.subr.mxu0 0.0
        %635 = vmatpush1.xpose.msra.mxu0 0.0
        %636 = vmatprep.subr.mxu0 0.0
        %637 = vmatpush1.xpose.msra.mxu0 0.0
        %638 = vmatprep.subr.mxu0 0.0
        %639 = vmatpush1.xpose.msra.mxu0 0.0
        %640 = vmatprep.subr.mxu0 0.0
        %641 = vmatpush1.xpose.msra.mxu0 0.0
        %642 = vmatprep.subr.mxu0 0.0
        %643 = vmatpush1.xpose.msra.mxu0 0.0
        %644 = vmatprep.subr.mxu0 0.0
        %645 = vmatpush1.xpose.msra.mxu0 0.0
        %646 = vmatprep.subr.mxu0 0.0
        %647 = vmatpush1.xpose.msra.mxu0 0.0
        %648 = vmatprep.subr.mxu0 0.0
        %649 = vmatpush1.xpose.msra.mxu0 0.0
        %650 = vmatprep.mubr.f32.mxu0 %v424
        %651 = vmatmul.mubr.f32.gmra.mrb[0].mxu0 %v423
        %v652 = vpop.f32.mrb[0].mxu0
        %v653 = vadd.f32 %v583, %v652
        %v654 = vpop.f32.mrb[0].mxu0
        %655 = vdwg.mxu0
        %v656 = vadd.f32 %v451, %v653
        %657 = vst [vmem:[%s398] sm:$0xff] %v656
        %v658 = vld [vmem:[#allocation2] sm:$0xff]
        %v659 = vld [vmem:[%s355] sm:$0xff]
        %v660 = vld [vmem:[%s355 + $0x8] sm:$0xff]
        %v661 = vld [vmem:[%s355 + $0x10] sm:$0xff]
        %v662 = vld [vmem:[%s355 + $0x18] sm:$0xff]
        %v663 = vld [vmem:[%s355 + $0x20] sm:$0xff]
        %v664 = vld [vmem:[%s355 + $0x28] sm:$0xff]
        %v665 = vld [vmem:[%s355 + $0x30] sm:$0xff]
        %v666 = vld [vmem:[%s355 + $0x38] sm:$0xff]
        %v667 = vld [vmem:[%s355 + $0x40] sm:$0xff]
        %v668 = vld [vmem:[%s355 + $0x48] sm:$0xff]
        %v669 = vld [vmem:[%s355 + $0x50] sm:$0xff]
        %v670 = vld [vmem:[%s355 + $0x58] sm:$0xff]
        %v671 = vld [vmem:[%s355 + $0x60] sm:$0xff]
        %v672 = vld [vmem:[%s355 + $0x68] sm:$0xff]
        %v673 = vld [vmem:[%s355 + $0x70] sm:$0xff]
        %v674 = vld [vmem:[%s355 + $0x78] sm:$0xff]
        %v675 = vld [vmem:[%s355 + $0x80] sm:$0xff]
        %v676 = vld [vmem:[%s355 + $0x88] sm:$0xff]
        %v677 = vld [vmem:[%s355 + $0x90] sm:$0xff]
        %v678 = vld [vmem:[%s355 + $0x98] sm:$0xff]
        %v679 = vld [vmem:[%s355 + $0xa0] sm:$0xff]
        %v680 = vld [vmem:[%s355 + $0xa8] sm:$0xff]
        %v681 = vld [vmem:[%s355 + $0xb0] sm:$0xff]
        %v682 = vld [vmem:[%s355 + $0xb8] sm:$0xff]
        %v683 = vld [vmem:[%s355 + $0xc0] sm:$0xff]
        %v684 = vld [vmem:[%s355 + $0xc8] sm:$0xff]
        %v685 = vld [vmem:[%s355 + $0xd0] sm:$0xff]
        %v686 = vld [vmem:[%s355 + $0xd8] sm:$0xff]
        %v687 = vld [vmem:[%s355 + $0xe0] sm:$0xff]
        %v688 = vld [vmem:[%s355 + $0xe8] sm:$0xff]
        %v689 = vld [vmem:[%s355 + $0xf0] sm:$0xff]
        %v690 = vld [vmem:[%s355 + $0xf8] sm:$0xff]
        %v691 = vld [vmem:[%s355 + $0x100] sm:$0xff]
        %v692 = vld [vmem:[%s355 + $0x108] sm:$0xff]
        %v693 = vld [vmem:[%s355 + $0x110] sm:$0xff]
        %v694 = vld [vmem:[%s355 + $0x118] sm:$0xff]
        %v695 = vld [vmem:[%s355 + $0x120] sm:$0xff]
        %v696 = vld [vmem:[%s355 + $0x128] sm:$0xff]
        %v697 = vld [vmem:[%s355 + $0x130] sm:$0xff]
        %v698 = vld [vmem:[%s355 + $0x138] sm:$0xff]
        %v699 = vld [vmem:[%s355 + $0x140] sm:$0xff]
        %v700 = vld [vmem:[%s355 + $0x148] sm:$0xff]
        %v701 = vld [vmem:[%s355 + $0x150] sm:$0xff]
        %v702 = vld [vmem:[%s355 + $0x158] sm:$0xff]
        %v703 = vld [vmem:[%s355 + $0x160] sm:$0xff]
        %v704 = vld [vmem:[%s355 + $0x168] sm:$0xff]
        %v705 = vld [vmem:[%s355 + $0x170] sm:$0xff]
        %v706 = vld [vmem:[%s355 + $0x178] sm:$0xff]
        %v707 = vld [vmem:[%s355 + $0x180] sm:$0xff]
        %v708 = vld [vmem:[%s355 + $0x188] sm:$0xff]
        %v709 = vld [vmem:[%s355 + $0x190] sm:$0xff]
        %v710 = vld [vmem:[%s355 + $0x198] sm:$0xff]
        %v711 = vld [vmem:[%s355 + $0x1a0] sm:$0xff]
        %v712 = vld [vmem:[%s355 + $0x1a8] sm:$0xff]
        %v713 = vld [vmem:[%s355 + $0x1b0] sm:$0xff]
        %v714 = vld [vmem:[%s355 + $0x1b8] sm:$0xff]
        %v715 = vld [vmem:[%s355 + $0x1c0] sm:$0xff]
        %v716 = vld [vmem:[%s355 + $0x1c8] sm:$0xff]
        %v717 = vld [vmem:[%s355 + $0x1d0] sm:$0xff]
        %v718 = vld [vmem:[%s355 + $0x1d8] sm:$0xff]
        %v719 = vld [vmem:[%s355 + $0x1e0] sm:$0xff]
        %v720 = vld [vmem:[%s355 + $0x1e8] sm:$0xff]
        %v721 = vld [vmem:[%s355 + $0x1f0] sm:$0xff]
        %v722 = vld [vmem:[%s355 + $0x1f8] sm:$0xff]
        %723 = vmatprep.subr.mxu0 %v660
        %724 = vmatpush1.xpose.msra.mxu0 %v659
        %725 = vmatprep.subr.mxu0 %v664
        %726 = vmatpush1.xpose.msra.mxu0 %v663
        %727 = vmatprep.subr.mxu0 %v668
        %728 = vmatpush1.xpose.msra.mxu0 %v667
        %729 = vmatprep.subr.mxu0 %v672
        %730 = vmatpush1.xpose.msra.mxu0 %v671
        %731 = vmatprep.subr.mxu0 %v676
        %732 = vmatpush1.xpose.msra.mxu0 %v675
        %733 = vmatprep.subr.mxu0 %v680
        %734 = vmatpush1.xpose.msra.mxu0 %v679
        %735 = vmatprep.subr.mxu0 %v684
        %736 = vmatpush1.xpose.msra.mxu0 %v683
        %737 = vmatprep.subr.mxu0 %v688
        %738 = vmatpush1.xpose.msra.mxu0 %v687
        %739 = vmatprep.subr.mxu0 %v692
        %740 = vmatpush1.xpose.msra.mxu0 %v691
        %741 = vmatprep.subr.mxu0 %v696
        %742 = vmatpush1.xpose.msra.mxu0 %v695
        %743 = vmatprep.subr.mxu0 %v700
        %744 = vmatpush1.xpose.msra.mxu0 %v699
        %745 = vmatprep.subr.mxu0 %v704
        %746 = vmatpush1.xpose.msra.mxu0 %v703
        %747 = vmatprep.subr.mxu0 %v708
        %748 = vmatpush1.xpose.msra.mxu0 %v707
        %749 = vmatprep.subr.mxu0 %v712
        %750 = vmatpush1.xpose.msra.mxu0 %v711
        %751 = vmatprep.subr.mxu0 %v716
        %752 = vmatpush1.xpose.msra.mxu0 %v715
        %753 = vmatprep.subr.mxu0 %v720
        %754 = vmatpush1.xpose.msra.mxu0 %v719
        %755 = vmatprep.subr.mxu0 0.0
        %756 = vmatpush1.xpose.msra.mxu0 0.0
        %757 = vmatprep.subr.mxu0 0.0
        %758 = vmatpush1.xpose.msra.mxu0 0.0
        %759 = vmatprep.subr.mxu0 0.0
        %760 = vmatpush1.xpose.msra.mxu0 0.0
        %761 = vmatprep.subr.mxu0 0.0
        %762 = vmatpush1.xpose.msra.mxu0 0.0
        %763 = vmatprep.subr.mxu0 0.0
        %764 = vmatpush1.xpose.msra.mxu0 0.0
        %765 = vmatprep.subr.mxu0 0.0
        %766 = vmatpush1.xpose.msra.mxu0 0.0
        %767 = vmatprep.subr.mxu0 0.0
        %768 = vmatpush1.xpose.msra.mxu0 0.0
        %769 = vmatprep.subr.mxu0 0.0
        %770 = vmatpush1.xpose.msra.mxu0 0.0
        %771 = vmatprep.subr.mxu0 0.0
        %772 = vmatpush1.xpose.msra.mxu0 0.0
        %773 = vmatprep.subr.mxu0 0.0
        %774 = vmatpush1.xpose.msra.mxu0 0.0
        %775 = vmatprep.subr.mxu0 0.0
        %776 = vmatpush1.xpose.msra.mxu0 0.0
        %777 = vmatprep.subr.mxu0 0.0
        %778 = vmatpush1.xpose.msra.mxu0 0.0
        %779 = vmatprep.subr.mxu0 0.0
        %780 = vmatpush1.xpose.msra.mxu0 0.0
        %781 = vmatprep.subr.mxu0 0.0
        %782 = vmatpush1.xpose.msra.mxu0 0.0
        %783 = vmatprep.subr.mxu0 0.0
        %784 = vmatpush1.xpose.msra.mxu0 0.0
        %785 = vmatprep.subr.mxu0 0.0
        %786 = vmatpush1.xpose.msra.mxu0 0.0
        %787 = vmatprep.mubr.f32.mxu0 %v448
        %788 = vmatmul.mubr.f32.gmra.mrb[0].mxu0 %v447
        %v789 = vpop.f32.mrb[0].mxu0
        %v790 = vadd.f32 0.0, %v789
        %v791 = vpop.f32.mrb[0].mxu0
        %792 = vdwg.mxu0
        %793 = vmatprep.subr.mxu0 %v662
        %794 = vmatpush1.xpose.msra.mxu0 %v661
        %795 = vmatprep.subr.mxu0 %v666
        %796 = vmatpush1.xpose.msra.mxu0 %v665
        %797 = vmatprep.subr.mxu0 %v670
        %798 = vmatpush1.xpose.msra.mxu0 %v669
        %799 = vmatprep.subr.mxu0 %v674
        %800 = vmatpush1.xpose.msra.mxu0 %v673
        %801 = vmatprep.subr.mxu0 %v678
        %802 = vmatpush1.xpose.msra.mxu0 %v677
        %803 = vmatprep.subr.mxu0 %v682
        %804 = vmatpush1.xpose.msra.mxu0 %v681
        %805 = vmatprep.subr.mxu0 %v686
        %806 = vmatpush1.xpose.msra.mxu0 %v685
        %807 = vmatprep.subr.mxu0 %v690
        %808 = vmatpush1.xpose.msra.mxu0 %v689
        %809 = vmatprep.subr.mxu0 %v694
        %810 = vmatpush1.xpose.msra.mxu0 %v693
        %811 = vmatprep.subr.mxu0 %v698
        %812 = vmatpush1.xpose.msra.mxu0 %v697
        %813 = vmatprep.subr.mxu0 %v702
        %814 = vmatpush1.xpose.msra.mxu0 %v701
        %815 = vmatprep.subr.mxu0 %v706
        %816 = vmatpush1.xpose.msra.mxu0 %v705
        %817 = vmatprep.subr.mxu0 %v710
        %818 = vmatpush1.xpose.msra.mxu0 %v709
        %819 = vmatprep.subr.mxu0 %v714
        %820 = vmatpush1.xpose.msra.mxu0 %v713
        %821 = vmatprep.subr.mxu0 %v718
        %822 = vmatpush1.xpose.msra.mxu0 %v717
        %823 = vmatprep.subr.mxu0 %v722
        %824 = vmatpush1.xpose.msra.mxu0 %v721
        %825 = vmatprep.subr.mxu0 0.0
        %826 = vmatpush1.xpose.msra.mxu0 0.0
        %827 = vmatprep.subr.mxu0 0.0
        %828 = vmatpush1.xpose.msra.mxu0 0.0
        %829 = vmatprep.subr.mxu0 0.0
        %830 = vmatpush1.xpose.msra.mxu0 0.0
        %831 = vmatprep.subr.mxu0 0.0
        %832 = vmatpush1.xpose.msra.mxu0 0.0
        %833 = vmatprep.subr.mxu0 0.0
        %834 = vmatpush1.xpose.msra.mxu0 0.0
        %835 = vmatprep.subr.mxu0 0.0
        %836 = vmatpush1.xpose.msra.mxu0 0.0
        %837 = vmatprep.subr.mxu0 0.0
        %838 = vmatpush1.xpose.msra.mxu0 0.0
        %839 = vmatprep.subr.mxu0 0.0
        %840 = vmatpush1.xpose.msra.mxu0 0.0
        %841 = vmatprep.subr.mxu0 0.0
        %842 = vmatpush1.xpose.msra.mxu0 0.0
        %843 = vmatprep.subr.mxu0 0.0
        %844 = vmatpush1.xpose.msra.mxu0 0.0
        %845 = vmatprep.subr.mxu0 0.0
        %846 = vmatpush1.xpose.msra.mxu0 0.0
        %847 = vmatprep.subr.mxu0 0.0
        %848 = vmatpush1.xpose.msra.mxu0 0.0
        %849 = vmatprep.subr.mxu0 0.0
        %850 = vmatpush1.xpose.msra.mxu0 0.0
        %851 = vmatprep.subr.mxu0 0.0
        %852 = vmatpush1.xpose.msra.mxu0 0.0
        %853 = vmatprep.subr.mxu0 0.0
        %854 = vmatpush1.xpose.msra.mxu0 0.0
        %855 = vmatprep.subr.mxu0 0.0
        %856 = vmatpush1.xpose.msra.mxu0 0.0
        %857 = vmatprep.mubr.f32.mxu0 %v450
        %858 = vmatmul.mubr.f32.gmra.mrb[0].mxu0 %v449
        %v859 = vpop.f32.mrb[0].mxu0
        %v860 = vadd.f32 %v790, %v859
        %v861 = vpop.f32.mrb[0].mxu0
        %862 = vdwg.mxu0
        %v863 = vadd.f32 %v658, %v860
        %864 = vst [vmem:[#allocation2] sm:$0xff] %v863
        // Predicated region
        $region61: #{tpu_custom_call.1} parent=43 // pred_check
          %p865 = pneg %p415
        $region62: #{tpu_custom_call.1} parent=43 // pred_check_branch
          %867 = sbr.rel (%p865) target = $region64
        $region63: #{tpu_custom_call.1} parent=43 // pred_region
          %v868 = vld [vmem:[%s398] sm:$0xff]
          %v869 = vld [vmem:[%s411] sm:$0x1]
          %v870 = vld [vmem:[#allocation2] sm:$0xff]
          %v872 = vlaneseq
          %v873 = vshrl.u32 %v872, 7
          %v874 = vsub.s32 0, %v873
          %v875 = vrot.slane %v869, %v874
          %v877 = vmul.f32 %v875, %v870
          %v878 = vadd.f32 %v868, %v877
          %v879 = vld [vmem:[%s414] sm:$0x1]
          %v881 = vlaneseq
          %v882 = vshrl.u32 %v881, 7
          %v883 = vsub.s32 0, %v882
          %v884 = vrot.slane %v879, %v883
          %v886 = vadd.f32 %v878, %v884
          %887 = vst [vmem:[%s398] sm:$0xff] %v886
        $region64: #{tpu_custom_call.1} parent=43 // pred_fallthru
          _
        %s888 = sand.u32 %s215, 1
        %s889 = scalar_lea.sflag [#allocation5], %s888
        %s890 = sand.u32 %s215, 1
        %s891 = smul.addr %s890, 8
        %s892 = scalar_lea.vmem [#allocation9], %s891
        // Predicated region
        $region65: #{tpu_custom_call.1} parent=43 // pred_check
          %p893 = pneg %p225
        $region66: #{tpu_custom_call.1} parent=43 // pred_check_branch
          %895 = sbr.rel (%p893) target = $region68
        $region67: #{tpu_custom_call.1} parent=43 // pred_region
          %s897 = ssub.s32 128, 128
          %898 = vsyncadd %s889, %s897
          %s899 = smul.addr %s29, 2
          %s900 = sadd.s32 %s30, %s899
          %s901 = smul.addr %s900, 128
          %s902 = scalar_lea.hbm %s6, %s901
          %s904 = sshll.u32 %s892, 4
          %s905 = int_to_ptr.vmem [resolvable:$true] %s904
          %907 = dma.vmem_to_hbm [thread:$0]  %s905, 128, %s902, %s889
        $region68: #{tpu_custom_call.1} parent=43 // pred_fallthru
          _
      $region44: #{tpu_custom_call.1} parent=5 // pred_fallthru
        _
      %p908 = scmp.le.s32.totalorder 2, %s19
      // Predicated region
      $region69: #{tpu_custom_call.1} parent=5 // pred_check
        %p909 = pneg %p908
      $region70: #{tpu_custom_call.1} parent=5 // pred_check_branch
        %911 = sbr.rel (%p909) target = $region72
      $region71: #{tpu_custom_call.1} parent=5 // pred_region
        %s912 = ssub.s32 %s19, 2
        // Predicated region
        $region73: #{tpu_custom_call.1} parent=71 // pred_check
          %p913 = pneg %p231
        $region74: #{tpu_custom_call.1} parent=71 // pred_check_branch
          %915 = sbr.rel (%p913) target = $region76
        $region75: #{tpu_custom_call.1} parent=71 // pred_region
          %s916 = sand.u32 %s216, 1
          %s917 = scalar_lea.sflag [#allocation5], %s916
          %s918 = sand.u32 %s216, 1
          %s919 = smul.addr %s918, 8
          %s920 = scalar_lea.vmem [#allocation9], %s919
          %921 = dma.done %s917, 128
        $region76: #{tpu_custom_call.1} parent=71 // pred_fallthru
          _
      $region72: #{tpu_custom_call.1} parent=5 // pred_fallthru
        _
    $region6: #{tpu_custom_call.1} parent=1 // loop_footer
      %s23 = sadd.s32 1, %s19
    $region7: #{tpu_custom_call.1} parent=1 // loop_footer_branch
      %18 = sbr.rel target = $region3
    $region8: #{tpu_custom_call.1} parent=1 // loop_exit
      _
    %922 = vsyncpa [#allocation4], 1
    %s923 = scalar_lea.sflag [#allocation4], 1
    %924 = vsyncpa %s923, 1
    %925 = vsyncpa [#allocation7], 1
    %s926 = scalar_lea.sflag [#allocation7], 1
    %927 = vsyncpa %s926, 1
    %928 = vsyncpa [#allocation5], 1
    %s929 = scalar_lea.sflag [#allocation5], 1
    %930 = vsyncpa %s929, 1

</llo_original>
